<compile_context>
chip_gen: v7x
topology: tpu7x:2x2x1
jax: 0.10.0
libtpu: 0.0.40
codegen_flags: <defaults>
</compile_context>

<pallas_src>
import functools

import jax
import jax.numpy as jnp
from jax.experimental import pallas as pl
from jax.experimental.pallas import tpu as pltpu


def _round_up(x, m):
    return (x + m - 1) // m * m


def _device_kind():
    try:
        return jax.devices()[0].device_kind.lower()
    except Exception:
        return ""


def _vmem_budget_bytes(kind):
    """Per-pallas_call VMEM budget used to size tiles (below physical VMEM)."""
    if "v7" in kind:                                   # 64 MiB per TensorCore
        return 40 << 20
    if "v5 lite" in kind or "v5e" in kind or "v5lite" in kind:
        return 64 << 20                                # 128 MiB physical
    return 96 << 20                                    # v6e & default: 128 MiB


# -----------------------------------------------------------------------------
# Kernels
# -----------------------------------------------------------------------------
def _generator_kernel_fused(x_ref, w_ref, b_ref, o_ref):
    """Whole (padded) vocab resident: fused bf16 matmul + stable log_softmax."""
    logits = jnp.dot(x_ref[...], w_ref[...],
                     preferred_element_type=jnp.float32) + b_ref[...]
    m = jnp.max(logits, axis=-1, keepdims=True)
    shifted = logits - m
    lse = jnp.log(jnp.sum(jnp.exp(shifted), axis=-1, keepdims=True))
    o_ref[...] = (shifted - lse).astype(o_ref.dtype)


def _generator_kernel_streamed(x_ref, w_ref, b_ref, o_ref,
                               logits_ref, m_ref, l_ref):
    """Vocab-streamed single-pass log_softmax.

    Grid = (row_tiles, vocab_tiles).  The x row tile and the output block stay
    resident across the vocab axis; only the weight columns stream from HBM
    (read exactly ONCE per row tile -- no second-pass matmul recompute).  Per
    vocab tile we stage the f32 logits into a VMEM scratch and update the
    running max / sum-exp; at the last vocab tile the whole row block is
    finalized and written.
    """
    j = pl.program_id(1)

    @pl.when(j == 0)
    def _init():
        m_ref[...] = jnp.full(m_ref.shape, -jnp.inf, dtype=m_ref.dtype)
        l_ref[...] = jnp.zeros(l_ref.shape, dtype=l_ref.dtype)

    # bf16 x bf16 -> f32 accumulation on the MXU; bias added in f32.
    logits = jnp.dot(x_ref[...], w_ref[...],
                     preferred_element_type=jnp.float32) + b_ref[...]
    logits_ref[j] = logits                      # stage f32 logits for this tile

    m_prev = m_ref[...]
    m_new = jnp.maximum(m_prev, jnp.max(logits, axis=-1, keepdims=True))
    l_ref[...] = (l_ref[...] * jnp.exp(m_prev - m_new)
                  + jnp.sum(jnp.exp(logits - m_new), axis=-1, keepdims=True))
    m_ref[...] = m_new

    @pl.when(j == pl.num_programs(1) - 1)
    def _finalize():
        nj, _, tn = logits_ref.shape            # static
        corr = m_ref[...] + jnp.log(l_ref[...])         # (tm, 1)
        for jj in range(nj):                    # static, lane-dense slices
            o_ref[:, jj * tn:(jj + 1) * tn] = (
                logits_ref[jj] - corr).astype(o_ref.dtype)


# -----------------------------------------------------------------------------
# Wrapper
# -----------------------------------------------------------------------------
@functools.partial(jax.jit, static_argnames=("tm", "tn", "out_dtype", "path"))
def generator_forward(x, w, b, *, tm=None, tn=None, out_dtype=None, path=None):
    """log_softmax(x @ w + b, axis=-1).

    x: (batch, seq, d_model); w: (d_model, ntoken) = torch weight transposed;
    b: (ntoken,).  path: None (auto) | "fused" | "streamed".
    """
    batch, seq, d_model = x.shape
    ntoken = w.shape[1]
    out_dtype = x.dtype if out_dtype is None else out_dtype
    out_b = jnp.dtype(out_dtype).itemsize
    # TODO(synk): for training, fuse the downstream cross-entropy / label
    # gather so the (rows, ntoken) log-prob tensor is never written to HBM
    # (or pass out_dtype=jnp.bfloat16 to halve the output writeback on v6e).

    rows = batch * seq
    rows16 = _round_up(rows, 16)               # bf16 packs 16 sublanes / vreg

    kind = _device_kind()
    budget = _vmem_budget_bytes(kind)
    multi_core = "v7" in kind                  # 2 TensorCores / chip

    # --- vocab tile / padded vocab (lane-dense multiple of 128) ---
    tn_req = 1024 if tn is None else tn
    tn_eff = max(128, min(_round_up(tn_req, 128), _round_up(ntoken, 128)))
    npad = _round_up(ntoken, tn_eff)
    n_vocab_tiles = npad // tn_eff

    # --- row tile from the VMEM budget ---
    tm_req = 1024 if tm is None else tm
    tm_eff = max(16, min(_round_up(tm_req, 16), rows16))
    if multi_core and rows16 >= 32 and tm_eff >= rows16:
        # Keep both v7x TensorCores busy: at least two row tiles when possible.
        tm_eff = max(16, _round_up(rows16 // 2, 16))

    def _footprint_fused(tm_):
        return (2 * tm_ * d_model * 2          # x tile (double-buffered)
                + 2 * d_model * npad * 2       # full bf16 weight
                + 2 * npad * 4                 # bias
                + 2 * tm_ * npad * out_b       # output tile
                + tm_ * npad * 4)              # f32 logits temporaries

    def _footprint_streamed(tm_):
        return (2 * tm_ * d_model * 2          # x tile
                + 2 * d_model * tn_eff * 2     # weight column tile
                + 2 * tn_eff * 4               # bias tile
                + 2 * tm_ * npad * out_b       # resident output block
                + tm_ * npad * 4               # f32 staged-logits scratch
                + 4 * tm_ * 4)                 # running max / sum-exp

    if path == "fused":
        use_fused = True
    elif path == "streamed":
        use_fused = False
    else:
        use_fused = _footprint_fused(tm_eff) <= budget

    if not use_fused:
        # Shrink tm until the streamed footprint fits the budget.
        per_row = 2 * d_model * 2 + 2 * npad * out_b + npad * 4 + 16
        fixed = 2 * d_model * tn_eff * 2 + 2 * tn_eff * 4 + (1 << 20)
        if budget > fixed:
            tm_fit = max(16, ((budget - fixed) // per_row // 16) * 16)
        else:
            tm_fit = 16
        tm_eff = max(16, min(tm_eff, tm_fit))

    rows_p = _round_up(rows, tm_eff)
    n_row_tiles = rows_p // tm_eff

    footprint = (_footprint_fused(tm_eff) if use_fused
                 else _footprint_streamed(tm_eff))
    phys_cap = (56 << 20) if multi_core else (110 << 20)
    vmem_limit = int(min(max(footprint * 5 // 4 + (2 << 20), 32 << 20),
                         phys_cap))
    vmem_limit = int(max(vmem_limit, footprint + (1 << 20)))

    # --- pad + cast operands: bf16 matmul inputs, f32 bias / softmax math ---
    x2 = x.reshape(rows, d_model).astype(jnp.bfloat16)
    if rows_p != rows:
        x2 = jnp.pad(x2, ((0, rows_p - rows), (0, 0)))
    w_p = w.astype(jnp.bfloat16)
    if npad != ntoken:
        w_p = jnp.pad(w_p, ((0, 0), (0, npad - ntoken)))
    # Padded vocab columns get a huge negative bias so they never win the max
    # and contribute ~0 to the sum-exp (they end up ~-1e30 and are sliced off).
    b_p = jnp.full((1, npad), -1e30, dtype=jnp.float32)
    b_p = b_p.at[0, :ntoken].set(b.astype(jnp.float32))

    if use_fused:
        cost = pl.CostEstimate(
            flops=2 * rows_p * d_model * npad,
            transcendentals=rows_p * npad,
            bytes_accessed=(rows_p * d_model * 2 + d_model * npad * 2
                            + npad * 4 + rows_p * npad * out_b))
        out_p = pl.pallas_call(
            _generator_kernel_fused,
            out_shape=jax.ShapeDtypeStruct((rows_p, npad), out_dtype),
            grid_spec=pltpu.PrefetchScalarGridSpec(
                num_scalar_prefetch=0,
                grid=(n_row_tiles,),
                in_specs=[
                    pl.BlockSpec((tm_eff, d_model), lambda i: (i, 0)),
                    pl.BlockSpec((d_model, npad), lambda i: (0, 0)),
                    pl.BlockSpec((1, npad), lambda i: (0, 0)),
                ],
                out_specs=pl.BlockSpec((tm_eff, npad), lambda i: (i, 0)),
            ),
            compiler_params=pltpu.CompilerParams(
                dimension_semantics=("parallel",),
                vmem_limit_bytes=vmem_limit),
            cost_estimate=cost,
        )(x2, w_p, b_p)
    else:
        cost = pl.CostEstimate(
            flops=2 * rows_p * d_model * npad,
            transcendentals=rows_p * npad,
            bytes_accessed=(rows_p * d_model * 2
                            + n_row_tiles * d_model * npad * 2
                            + npad * 4 + rows_p * npad * out_b))
        out_p = pl.pallas_call(
            _generator_kernel_streamed,
            out_shape=jax.ShapeDtypeStruct((rows_p, npad), out_dtype),
            grid_spec=pltpu.PrefetchScalarGridSpec(
                num_scalar_prefetch=0,
                grid=(n_row_tiles, n_vocab_tiles),
                in_specs=[
                    # x row tile resident across the vocab axis.
                    pl.BlockSpec((tm_eff, d_model), lambda i, j: (i, 0)),
                    # Only weight columns + bias slice stream; read once per
                    # row tile.  TODO(synk): pipeline_mode=pl.Buffered(3) on
                    # the weight spec if profiling shows exposed DMA at
                    # row-tile boundaries.
                    pl.BlockSpec((d_model, tn_eff), lambda i, j: (0, j)),
                    pl.BlockSpec((1, tn_eff), lambda i, j: (0, j)),
                ],
                # Output block resident across the vocab axis; written exactly
                # once, at the last vocab tile (flash-attention style).
                out_specs=pl.BlockSpec((tm_eff, npad), lambda i, j: (i, 0)),
                scratch_shapes=[
                    pltpu.VMEM((n_vocab_tiles, tm_eff, tn_eff), jnp.float32),
                    pltpu.VMEM((tm_eff, 1), jnp.float32),   # running max
                    pltpu.VMEM((tm_eff, 1), jnp.float32),   # running sum-exp
                ],
            ),
            compiler_params=pltpu.CompilerParams(
                dimension_semantics=("parallel", "arbitrary"),
                vmem_limit_bytes=vmem_limit),
            cost_estimate=cost,
        )(x2, w_p, b_p)

    return out_p[:rows, :ntoken].reshape(batch, seq, ntoken)


# -----------------------------------------------------------------------------
# References
# -----------------------------------------------------------------------------
def reference_forward(x, w, b):
    logits = jnp.einsum("bsd,dn->bsn", x, w) + b
    return jax.nn.log_softmax(logits, axis=-1)


def reference_forward_bf16(x, w, b):
    logits = jnp.einsum("bsd,dn->bsn",
                        x.astype(jnp.bfloat16), w.astype(jnp.bfloat16),
                        preferred_element_type=jnp.float32) + b
    return jax.nn.log_softmax(logits, axis=-1)


if __name__ == "__main__":
    batch, seq, d_model = 2, 7, 32      # rows=14 -> exercises row padding

    key = jax.random.PRNGKey(0)
    kx = jax.random.fold_in(key, 0)
    x = jax.random.normal(kx, (batch, seq, d_model), dtype=jnp.float32)
    bound = 1.0 / (d_model ** 0.5)

    # (ntoken, forced path, tn): exercises the fused path, the vocab-streamed
    # single-pass path (4 vocab tiles + 24 padded columns), and a 128-vocab
    # fused case with no vocab padding.
    cases = [(1000, None, None), (1000, "streamed", 256), (128, None, None)]
    for ntoken, path, tn in cases:
        kw_i = jax.random.fold_in(key, 10 + ntoken)
        kb_i = jax.random.fold_in(key, 20 + ntoken)
        w = jax.random.uniform(kw_i, (d_model, ntoken), jnp.float32,
                               -bound, bound)
        b = jax.random.uniform(kb_i, (ntoken,), jnp.float32, -bound, bound)

        out = jax.block_until_ready(
            generator_forward(x, w, b, tn=tn, path=path))
        assert out.shape == (batch, seq, ntoken)
        assert bool(jnp.all(jnp.isfinite(out))), \
            f"non-finite output (ntoken={ntoken}, path={path})"

        ref_f32 = reference_forward(x, w, b)          # torch f32 semantics
        ref_bf16 = reference_forward_bf16(x, w, b)    # same rounding as kernel

        assert jnp.allclose(out, ref_f32, atol=2e-2, rtol=2e-2), \
            f"mismatch vs f32 reference (ntoken={ntoken}, path={path})"
        assert jnp.allclose(out, ref_bf16, atol=2e-3, rtol=2e-3), \
            f"mismatch vs bf16-input reference (ntoken={ntoken}, path={path})"

    print("KERNEL_OK")
</pallas_src>

<mosaic_0001>
module attributes {stable_mosaic.version = 11 : i64} {
  func.func @_generator_kernel_fused(%arg0: i32, %arg1: memref<16x32xbf16, #tpu.memory_space<vmem>>, %arg2: memref<32x1024xbf16, #tpu.memory_space<vmem>>, %arg3: memref<1x1024xf32, #tpu.memory_space<vmem>>, %arg4: memref<16x1024xf32, #tpu.memory_space<vmem>>) attributes {dimension_semantics = [#tpu.dimension_semantics<parallel>], iteration_bounds = array<i64: 1>, scalar_prefetch = 0 : i64, scratch_operands = 0 : i64, tpu.core_type = #tpu.core_type<tc>, window_params = [{transform_indices = @transform_0, window_bounds = array<i64: 16, 32>}, {pipeline_mode = #tpu.pipeline_mode<synchronous>, transform_indices = @transform_1, window_bounds = array<i64: 32, 1024>}, {pipeline_mode = #tpu.pipeline_mode<synchronous>, transform_indices = @transform_2, window_bounds = array<i64: 1, 1024>}, {transform_indices = @transform_3, window_bounds = array<i64: 16, 1024>}]} {
    %c0 = arith.constant 0 : index
    %c0_0 = arith.constant 0 : index
    %0 = vector.load %arg1[%c0, %c0_0] : memref<16x32xbf16, #tpu.memory_space<vmem>>, vector<16x32xbf16>
    %c0_1 = arith.constant 0 : index
    %c0_2 = arith.constant 0 : index
    %1 = vector.load %arg2[%c0_1, %c0_2] : memref<32x1024xbf16, #tpu.memory_space<vmem>>, vector<32x1024xbf16>
    %cst = arith.constant dense<0.000000e+00> : vector<16x1024xf32>
    %2 = tpu.matmul %0, %1, %cst {dimension_numbers = #tpu.dot_dimension_numbers<[1], [0], [0], [1], [0, 0, 1, 1], [], []>} : vector<16x32xbf16>, vector<32x1024xbf16>, vector<16x1024xf32> -> vector<16x1024xf32>
    %c0_3 = arith.constant 0 : index
    %c0_4 = arith.constant 0 : index
    %3 = vector.load %arg3[%c0_3, %c0_4] : memref<1x1024xf32, #tpu.memory_space<vmem>>, vector<1x1024xf32>
    %4 = vector.broadcast %3 : vector<1x1024xf32> to vector<16x1024xf32>
    %5 = arith.addf %2, %4 : vector<16x1024xf32>
    %cst_5 = arith.constant dense<0xFF800000> : vector<16xf32>
    %6 = vector.multi_reduction <maximumf>, %5, %cst_5 [1] : vector<16x1024xf32> to vector<16xf32>
    %7 = vector.shape_cast %6 : vector<16xf32> to vector<16x1xf32>
    %8 = vector.broadcast %7 : vector<16x1xf32> to vector<16x1024xf32>
    %9 = arith.subf %5, %8 : vector<16x1024xf32>
    %10 = math.exp %9 : vector<16x1024xf32>
    %cst_6 = arith.constant dense<0.000000e+00> : vector<16xf32>
    %11 = vector.multi_reduction <add>, %10, %cst_6 [1] : vector<16x1024xf32> to vector<16xf32>
    %12 = vector.shape_cast %11 : vector<16xf32> to vector<16x1xf32>
    %13 = math.log %12 : vector<16x1xf32>
    %14 = vector.broadcast %13 : vector<16x1xf32> to vector<16x1024xf32>
    %15 = arith.subf %9, %14 : vector<16x1024xf32>
    %c0_7 = arith.constant 0 : index
    %c0_8 = arith.constant 0 : index
    %16 = vector.load %arg4[%c0_7, %c0_8] : memref<16x1024xf32, #tpu.memory_space<vmem>>, vector<16x1024xf32>
    tpu.vector_store %arg4[%c0_7, %c0_8], %15 {strides = array<i32>} : memref<16x1024xf32, #tpu.memory_space<vmem>>, vector<16x1024xf32>,
    return
  }
  func.func @transform_0(%arg0: i32) -> (i32, i32) {
    %c0_i32 = arith.constant 0 : i32
    %c0_i32_0 = arith.constant 0 : i32
    return %arg0, %c0_i32 : i32, i32
  }
  func.func @transform_1(%arg0: i32) -> (i32, i32) {
    %c0_i32 = arith.constant 0 : i32
    %c0_i32_0 = arith.constant 0 : i32
    %c0_i32_1 = arith.constant 0 : i32
    return %c0_i32, %c0_i32_0 : i32, i32
  }
  func.func @transform_2(%arg0: i32) -> (i32, i32) {
    %c0_i32 = arith.constant 0 : i32
    %c0_i32_0 = arith.constant 0 : i32
    %c0_i32_1 = arith.constant 0 : i32
    return %c0_i32, %c0_i32_0 : i32, i32
  }
  func.func @transform_3(%arg0: i32) -> (i32, i32) {
    %c0_i32 = arith.constant 0 : i32
    %c0_i32_0 = arith.constant 0 : i32
    return %arg0, %c0_i32 : i32, i32
  }
}

</mosaic_0001>

<llo_original>
// kernel: generator_forward.1
$region0: #{generator_forward.1}
  #allocation0 [shape = 'u32[]', space=smem, size = 0x4, offset = 0x4, fixed_abs, tag = 'smem constant byte address 0x4 - core index']
  #allocation1 [shape = 'u32[144,128]{1,0:T(1,128)}', space=vmem, size = 0x12000, scoped, tag = 'internal scratch']
  %s0 = inlined_call_operand.vmem [shape: bf16[16,32], index: 0, kind: input, shape index: {}]
  %s1 = inlined_call_operand.vmem [shape: bf16[32,1024], index: 1, kind: input, shape index: {}]
  %s2 = inlined_call_operand.vmem [shape: f32[1,1024], index: 2, kind: input, shape index: {}]
  %s3 = inlined_call_operand.vmem [shape: f32[16,1024], index: 3, kind: output, shape index: {}]
  %s4 = sld [smem:[#allocation0]]
  $region22: #{generator_forward.1} parent=0
    _
  %s6 = ssub.s32 1, %s4
  %s7 = scalar_select 0, %s6, %s4
  // Predicated region
  $region2: #{generator_forward.1} parent=0 // pred_check
    _
  $region3: #{generator_forward.1} parent=0 // pred_check_branch
    %9 = sbr.rel (0) target = $region5
  $region4: #{generator_forward.1} parent=0 // pred_region
    _
  $region5: #{generator_forward.1} parent=0 // pred_fallthru
    _
  // Predicated region
  $region6: #{generator_forward.1} parent=0 // pred_check
    _
  $region7: #{generator_forward.1} parent=0 // pred_check_branch
    %11 = sbr.rel (0) target = $region9
  $region8: #{generator_forward.1} parent=0 // pred_region
    _
  $region9: #{generator_forward.1} parent=0 // pred_fallthru
    _
  // Predicated region
  $region10: #{generator_forward.1} parent=0 // pred_check
    _
  $region11: #{generator_forward.1} parent=0 // pred_check_branch
    %13 = sbr.rel (0) target = $region13
  $region12: #{generator_forward.1} parent=0 // pred_region
    _
  $region13: #{generator_forward.1} parent=0 // pred_fallthru
    _
  %v15 = vld [vmem:[%s0] sm:$0xf]
  %v16 = vld [vmem:[%s0 + $0x4] sm:$0xf]
  %v17 = vld [vmem:[%s1] sm:$0xff]
  %v18 = vld [vmem:[%s1 + $0x8] sm:$0xff]
  %v19 = vld [vmem:[%s1 + $0x10] sm:$0xff]
  %v20 = vld [vmem:[%s1 + $0x18] sm:$0xff]
  %v21 = vld [vmem:[%s1 + $0x20] sm:$0xff]
  %v22 = vld [vmem:[%s1 + $0x28] sm:$0xff]
  %v23 = vld [vmem:[%s1 + $0x30] sm:$0xff]
  %v24 = vld [vmem:[%s1 + $0x38] sm:$0xff]
  %v25 = vld [vmem:[%s1 + $0x40] sm:$0xff]
  %v26 = vld [vmem:[%s1 + $0x48] sm:$0xff]
  %v27 = vld [vmem:[%s1 + $0x50] sm:$0xff]
  %v28 = vld [vmem:[%s1 + $0x58] sm:$0xff]
  %v29 = vld [vmem:[%s1 + $0x60] sm:$0xff]
  %v30 = vld [vmem:[%s1 + $0x68] sm:$0xff]
  %v31 = vld [vmem:[%s1 + $0x70] sm:$0xff]
  %v32 = vld [vmem:[%s1 + $0x78] sm:$0xff]
  %v33 = vld [vmem:[%s2] sm:$0xff]
  %v35 = vlaneseq
  %v36 = vshrl.u32 %v35, 7
  %v37 = vsub.s32 0, %v36
  %v38 = vrot.slane %v33, %v37
  %v39 = vlaneseq
  %v40 = vshrl.u32 %v39, 7
  %v41 = vsub.s32 1, %v40
  %v42 = vrot.slane %v33, %v41
  %v43 = vlaneseq
  %v44 = vshrl.u32 %v43, 7
  %v45 = vsub.s32 2, %v44
  %v46 = vrot.slane %v33, %v45
  %v47 = vlaneseq
  %v48 = vshrl.u32 %v47, 7
  %v49 = vsub.s32 3, %v48
  %v50 = vrot.slane %v33, %v49
  %v51 = vlaneseq
  %v52 = vshrl.u32 %v51, 7
  %v53 = vsub.s32 4, %v52
  %v54 = vrot.slane %v33, %v53
  %v55 = vlaneseq
  %v56 = vshrl.u32 %v55, 7
  %v57 = vsub.s32 5, %v56
  %v58 = vrot.slane %v33, %v57
  %v59 = vlaneseq
  %v60 = vshrl.u32 %v59, 7
  %v61 = vsub.s32 6, %v60
  %v62 = vrot.slane %v33, %v61
  %v63 = vlaneseq
  %v64 = vshrl.u32 %v63, 7
  %v65 = vsub.s32 7, %v64
  %v66 = vrot.slane %v33, %v65
  %v77 = vunpack.c.l.b16 %v15
  %v78 = vunpack.c.l.b16 %v16
  %v79 = vpack.c.b16 %v78, %v77
  %v96 = vunpack.c.l.b16 %v17
  %v97 = vunpack.c.h.b16 %v17
  %v98 = vunpack.c.l.b16 %v18
  %v99 = vunpack.c.h.b16 %v18
  %v100 = vunpack.c.l.b16 %v19
  %v101 = vunpack.c.h.b16 %v19
  %v102 = vunpack.c.l.b16 %v20
  %v103 = vunpack.c.h.b16 %v20
  %v104 = vunpack.c.l.b16 %v21
  %v105 = vunpack.c.h.b16 %v21
  %v106 = vunpack.c.l.b16 %v22
  %v107 = vunpack.c.h.b16 %v22
  %v108 = vunpack.c.l.b16 %v23
  %v109 = vunpack.c.h.b16 %v23
  %v110 = vunpack.c.l.b16 %v24
  %v111 = vunpack.c.h.b16 %v24
  %v112 = vunpack.c.l.b16 %v25
  %v113 = vunpack.c.h.b16 %v25
  %v114 = vunpack.c.l.b16 %v26
  %v115 = vunpack.c.h.b16 %v26
  %v116 = vunpack.c.l.b16 %v27
  %v117 = vunpack.c.h.b16 %v27
  %v118 = vunpack.c.l.b16 %v28
  %v119 = vunpack.c.h.b16 %v28
  %v120 = vunpack.c.l.b16 %v29
  %v121 = vunpack.c.h.b16 %v29
  %v122 = vunpack.c.l.b16 %v30
  %v123 = vunpack.c.h.b16 %v30
  %v124 = vunpack.c.l.b16 %v31
  %v125 = vunpack.c.h.b16 %v31
  %v126 = vunpack.c.l.b16 %v32
  %v127 = vunpack.c.h.b16 %v32
  %v128 = vpack.c.b16 %v104, %v96
  %v129 = vpack.c.b16 %v105, %v97
  %v130 = vpack.c.b16 %v106, %v98
  %v131 = vpack.c.b16 %v107, %v99
  %v132 = vpack.c.b16 %v108, %v100
  %v133 = vpack.c.b16 %v109, %v101
  %v134 = vpack.c.b16 %v110, %v102
  %v135 = vpack.c.b16 %v111, %v103
  %v136 = vpack.c.b16 %v120, %v112
  %v137 = vpack.c.b16 %v121, %v113
  %v138 = vpack.c.b16 %v122, %v114
  %v139 = vpack.c.b16 %v123, %v115
  %v140 = vpack.c.b16 %v124, %v116
  %v141 = vpack.c.b16 %v125, %v117
  %v142 = vpack.c.b16 %v126, %v118
  %v143 = vpack.c.b16 %v127, %v119
  %vm160 = vcmask 261120
  %v162 = vsel %vm160, %v79, 0
  %164 = vmatprep.subr.bf16.mxu0 %v129
  %165 = vmatpush1.bf16.msra.mxu0 %v128
  %166 = vmatprep.subr.bf16.mxu0 %v137
  %167 = vmatpush1.bf16.msra.mxu0 %v136
  %168 = vmatprep.subr.bf16.mxu0 0
  %169 = vmatpush1.bf16.msra.mxu0 0
  %170 = vmatprep.subr.bf16.mxu0 0
  %171 = vmatpush1.bf16.msra.mxu0 0
  %172 = vmatprep.subr.bf16.mxu0 0
  %173 = vmatpush1.bf16.msra.mxu0 0
  %174 = vmatprep.subr.bf16.mxu0 0
  %175 = vmatpush1.bf16.msra.mxu0 0
  %176 = vmatprep.subr.bf16.mxu0 0
  %177 = vmatpush1.bf16.msra.mxu0 0
  %178 = vmatprep.subr.bf16.mxu0 0
  %179 = vmatpush1.bf16.msra.mxu0 0
  %180 = vmatprep.subr.bf16.mxu0 0
  %181 = vmatpush1.bf16.msra.mxu0 0
  %182 = vmatprep.subr.bf16.mxu0 0
  %183 = vmatpush1.bf16.msra.mxu0 0
  %184 = vmatprep.subr.bf16.mxu0 0
  %185 = vmatpush1.bf16.msra.mxu0 0
  %186 = vmatprep.subr.bf16.mxu0 0
  %187 = vmatpush1.bf16.msra.mxu0 0
  %188 = vmatprep.subr.bf16.mxu0 0
  %189 = vmatpush1.bf16.msra.mxu0 0
  %190 = vmatprep.subr.bf16.mxu0 0
  %191 = vmatpush1.bf16.msra.mxu0 0
  %192 = vmatprep.subr.bf16.mxu0 0
  %193 = vmatpush1.bf16.msra.mxu0 0
  %194 = vmatprep.subr.bf16.mxu0 0
  %195 = vmatpush1.bf16.msra.mxu0 0
  %196 = vmatprep.mubr.bf16.mxu0 0
  %197 = vmatmul.mubr.bf16.gmra.mrb[0].mxu0 %v162
  %v198 = vpop.f32.mrb[0].mxu0
  %v199 = vadd.f32 %v38, %v198
  %v200 = vpop.f32.mrb[0].mxu0
  %v201 = vadd.f32 %v42, %v200
  %v202 = vpop.f32.mrb[0].mxu0
  %v203 = vadd.f32 %v38, %v202
  %v204 = vpop.f32.mrb[0].mxu0
  %v205 = vadd.f32 %v42, %v204
  %206 = vdwg.mxu0
  %207 = vmatprep.subr.bf16.mxu0 %v131
  %208 = vmatpush1.bf16.msra.mxu0 %v130
  %209 = vmatprep.subr.bf16.mxu0 %v139
  %210 = vmatpush1.bf16.msra.mxu0 %v138
  %211 = vmatprep.subr.bf16.mxu0 0
  %212 = vmatpush1.bf16.msra.mxu0 0
  %213 = vmatprep.subr.bf16.mxu0 0
  %214 = vmatpush1.bf16.msra.mxu0 0
  %215 = vmatprep.subr.bf16.mxu0 0
  %216 = vmatpush1.bf16.msra.mxu0 0
  %217 = vmatprep.subr.bf16.mxu0 0
  %218 = vmatpush1.bf16.msra.mxu0 0
  %219 = vmatprep.subr.bf16.mxu0 0
  %220 = vmatpush1.bf16.msra.mxu0 0
  %221 = vmatprep.subr.bf16.mxu0 0
  %222 = vmatpush1.bf16.msra.mxu0 0
  %223 = vmatprep.subr.bf16.mxu0 0
  %224 = vmatpush1.bf16.msra.mxu0 0
  %225 = vmatprep.subr.bf16.mxu0 0
  %226 = vmatpush1.bf16.msra.mxu0 0
  %227 = vmatprep.subr.bf16.mxu0 0
  %228 = vmatpush1.bf16.msra.mxu0 0
  %229 = vmatprep.subr.bf16.mxu0 0
  %230 = vmatpush1.bf16.msra.mxu0 0
  %231 = vmatprep.subr.bf16.mxu0 0
  %232 = vmatpush1.bf16.msra.mxu0 0
  %233 = vmatprep.subr.bf16.mxu0 0
  %234 = vmatpush1.bf16.msra.mxu0 0
  %235 = vmatprep.subr.bf16.mxu0 0
  %236 = vmatpush1.bf16.msra.mxu0 0
  %237 = vmatprep.subr.bf16.mxu0 0
  %238 = vmatpush1.bf16.msra.mxu0 0
  %239 = vmatprep.mubr.bf16.mxu0 0
  %240 = vmatmul.mubr.bf16.gmra.mrb[0].mxu0 %v162
  %v241 = vpop.f32.mrb[0].mxu0
  %v242 = vadd.f32 %v46, %v241
  %v243 = vpop.f32.mrb[0].mxu0
  %v244 = vadd.f32 %v50, %v243
  %v245 = vpop.f32.mrb[0].mxu0
  %v246 = vadd.f32 %v46, %v245
  %v247 = vpop.f32.mrb[0].mxu0
  %v248 = vadd.f32 %v50, %v247
  %249 = vdwg.mxu0
  %250 = vmatprep.subr.bf16.mxu0 %v133
  %251 = vmatpush1.bf16.msra.mxu0 %v132
  %252 = vmatprep.subr.bf16.mxu0 %v141
  %253 = vmatpush1.bf16.msra.mxu0 %v140
  %254 = vmatprep.subr.bf16.mxu0 0
  %255 = vmatpush1.bf16.msra.mxu0 0
  %256 = vmatprep.subr.bf16.mxu0 0
  %257 = vmatpush1.bf16.msra.mxu0 0
  %258 = vmatprep.subr.bf16.mxu0 0
  %259 = vmatpush1.bf16.msra.mxu0 0
  %260 = vmatprep.subr.bf16.mxu0 0
  %261 = vmatpush1.bf16.msra.mxu0 0
  %262 = vmatprep.subr.bf16.mxu0 0
  %263 = vmatpush1.bf16.msra.mxu0 0
  %264 = vmatprep.subr.bf16.mxu0 0
  %265 = vmatpush1.bf16.msra.mxu0 0
  %266 = vmatprep.subr.bf16.mxu0 0
  %267 = vmatpush1.bf16.msra.mxu0 0
  %268 = vmatprep.subr.bf16.mxu0 0
  %269 = vmatpush1.bf16.msra.mxu0 0
  %270 = vmatprep.subr.bf16.mxu0 0
  %271 = vmatpush1.bf16.msra.mxu0 0
  %272 = vmatprep.subr.bf16.mxu0 0
  %273 = vmatpush1.bf16.msra.mxu0 0
  %274 = vmatprep.subr.bf16.mxu0 0
  %275 = vmatpush1.bf16.msra.mxu0 0
  %276 = vmatprep.subr.bf16.mxu0 0
  %277 = vmatpush1.bf16.msra.mxu0 0
  %278 = vmatprep.subr.bf16.mxu0 0
  %279 = vmatpush1.bf16.msra.mxu0 0
  %280 = vmatprep.subr.bf16.mxu0 0
  %281 = vmatpush1.bf16.msra.mxu0 0
  %282 = vmatprep.mubr.bf16.mxu0 0
  %283 = vmatmul.mubr.bf16.gmra.mrb[0].mxu0 %v162
  %v284 = vpop.f32.mrb[0].mxu0
  %v285 = vadd.f32 %v54, %v284
  %v286 = vpop.f32.mrb[0].mxu0
  %v287 = vadd.f32 %v58, %v286
  %v288 = vpop.f32.mrb[0].mxu0
  %v289 = vadd.f32 %v54, %v288
  %v290 = vpop.f32.mrb[0].mxu0
  %v291 = vadd.f32 %v58, %v290
  %292 = vdwg.mxu0
  %293 = vmatprep.subr.bf16.mxu0 %v135
  %294 = vmatpush1.bf16.msra.mxu0 %v134
  %295 = vmatprep.subr.bf16.mxu0 %v143
  %296 = vmatpush1.bf16.msra.mxu0 %v142
  %297 = vmatprep.subr.bf16.mxu0 0
  %298 = vmatpush1.bf16.msra.mxu0 0
  %299 = vmatprep.subr.bf16.mxu0 0
  %300 = vmatpush1.bf16.msra.mxu0 0
  %301 = vmatprep.subr.bf16.mxu0 0
  %302 = vmatpush1.bf16.msra.mxu0 0
  %303 = vmatprep.subr.bf16.mxu0 0
  %304 = vmatpush1.bf16.msra.mxu0 0
  %305 = vmatprep.subr.bf16.mxu0 0
  %306 = vmatpush1.bf16.msra.mxu0 0
  %307 = vmatprep.subr.bf16.mxu0 0
  %308 = vmatpush1.bf16.msra.mxu0 0
  %309 = vmatprep.subr.bf16.mxu0 0
  %310 = vmatpush1.bf16.msra.mxu0 0
  %311 = vmatprep.subr.bf16.mxu0 0
  %312 = vmatpush1.bf16.msra.mxu0 0
  %313 = vmatprep.subr.bf16.mxu0 0
  %314 = vmatpush1.bf16.msra.mxu0 0
  %315 = vmatprep.subr.bf16.mxu0 0
  %316 = vmatpush1.bf16.msra.mxu0 0
  %317 = vmatprep.subr.bf16.mxu0 0
  %318 = vmatpush1.bf16.msra.mxu0 0
  %319 = vmatprep.subr.bf16.mxu0 0
  %320 = vmatpush1.bf16.msra.mxu0 0
  %321 = vmatprep.subr.bf16.mxu0 0
  %322 = vmatpush1.bf16.msra.mxu0 0
  %323 = vmatprep.subr.bf16.mxu0 0
  %324 = vmatpush1.bf16.msra.mxu0 0
  %325 = vmatprep.mubr.bf16.mxu0 0
  %326 = vmatmul.mubr.bf16.gmra.mrb[0].mxu0 %v162
  %v327 = vpop.f32.mrb[0].mxu0
  %v328 = vadd.f32 %v62, %v327
  %v329 = vpop.f32.mrb[0].mxu0
  %v330 = vadd.f32 %v66, %v329
  %v331 = vpop.f32.mrb[0].mxu0
  %v332 = vadd.f32 %v62, %v331
  %v333 = vpop.f32.mrb[0].mxu0
  %v334 = vadd.f32 %v66, %v333
  %335 = vdwg.mxu0
  %v336 = vmax.f32 %v199, %v242
  %v337 = vmax.f32 %v201, %v244
  %v338 = vmax.f32 %v336, %v285
  %v339 = vmax.f32 %v337, %v287
  %v340 = vmax.f32 %v338, %v328
  %v341 = vmax.f32 %v339, %v330
  %v342 = vmax.f32 %v340, %v341
  %343 = vmax.xlane.f32.xlu0 %v342
  %v344 = vpop.xlane.xlu0 %343
  %v345 = vmax.f32 %v203, %v246
  %v346 = vmax.f32 %v205, %v248
  %v347 = vmax.f32 %v345, %v289
  %v348 = vmax.f32 %v346, %v291
  %v349 = vmax.f32 %v347, %v332
  %v350 = vmax.f32 %v348, %v334
  %v351 = vmax.f32 %v349, %v350
  %352 = vmax.xlane.f32.xlu0 %v351
  %v353 = vpop.xlane.xlu0 %352
  %v354 = vsub.f32 %v199, %v344
  %v355 = vsub.f32 %v201, %v344
  %v356 = vsub.f32 %v242, %v344
  %v357 = vsub.f32 %v244, %v344
  %v358 = vsub.f32 %v285, %v344
  %v359 = vsub.f32 %v287, %v344
  %v360 = vsub.f32 %v328, %v344
  %v361 = vsub.f32 %v330, %v344
  %v362 = vsub.f32 %v203, %v353
  %v363 = vsub.f32 %v205, %v353
  %v364 = vsub.f32 %v246, %v353
  %v365 = vsub.f32 %v248, %v353
  %v366 = vsub.f32 %v289, %v353
  %v367 = vsub.f32 %v291, %v353
  %v368 = vsub.f32 %v332, %v353
  %v369 = vsub.f32 %v334, %v353
  %v370 = vmul.f32 %v354, 1.442695
  %v371 = vpow.pop %v370
  %v372 = vmul.f32 %v355, 1.442695
  %v373 = vpow.pop %v372
  %v374 = vmul.f32 %v356, 1.442695
  %v375 = vpow.pop %v374
  %v376 = vmul.f32 %v357, 1.442695
  %v377 = vpow.pop %v376
  %v378 = vmul.f32 %v358, 1.442695
  %v379 = vpow.pop %v378
  %v380 = vmul.f32 %v359, 1.442695
  %v381 = vpow.pop %v380
  %v382 = vmul.f32 %v360, 1.442695
  %v383 = vpow.pop %v382
  %v384 = vmul.f32 %v361, 1.442695
  %v385 = vpow.pop %v384
  %v386 = vmul.f32 %v362, 1.442695
  %v387 = vpow.pop %v386
  %v388 = vmul.f32 %v363, 1.442695
  %v389 = vpow.pop %v388
  %v390 = vmul.f32 %v364, 1.442695
  %v391 = vpow.pop %v390
  %v392 = vmul.f32 %v365, 1.442695
  %v393 = vpow.pop %v392
  %v394 = vmul.f32 %v366, 1.442695
  %v395 = vpow.pop %v394
  %v396 = vmul.f32 %v367, 1.442695
  %v397 = vpow.pop %v396
  %v398 = vmul.f32 %v368, 1.442695
  %v399 = vpow.pop %v398
  %v400 = vmul.f32 %v369, 1.442695
  %v401 = vpow.pop %v400
  %v402 = vadd.f32 %v371, %v373
  %v403 = vadd.f32 %v402, %v375
  %v404 = vadd.f32 %v403, %v377
  %v405 = vadd.f32 %v404, %v379
  %v406 = vadd.f32 %v405, %v381
  %v407 = vadd.f32 %v406, %v383
  %v408 = vadd.f32 %v407, %v385
  %409 = vadd.xlane.f32.xlu0 %v408
  %v410 = vpop.xlane.xlu0 %409
  %v411 = vadd.f32 %v387, %v389
  %v412 = vadd.f32 %v411, %v391
  %v413 = vadd.f32 %v412, %v393
  %v414 = vadd.f32 %v413, %v395
  %v415 = vadd.f32 %v414, %v397
  %v416 = vadd.f32 %v415, %v399
  %v417 = vadd.f32 %v416, %v401
  %418 = vadd.xlane.f32.xlu0 %v417
  %v419 = vpop.xlane.xlu0 %418
  %v420 = vlog2.pop %v410
  %v421 = vmul.f32 %v420, 0.6931472
  %v422 = vlog2.pop %v419
  %v423 = vmul.f32 %v422, 0.6931472
  %v424 = vsub.f32 %v354, %v421
  %v425 = vsub.f32 %v355, %v421
  %v426 = vsub.f32 %v356, %v421
  %v427 = vsub.f32 %v357, %v421
  %v428 = vsub.f32 %v358, %v421
  %v429 = vsub.f32 %v359, %v421
  %v430 = vsub.f32 %v360, %v421
  %v431 = vsub.f32 %v361, %v421
  %v432 = vsub.f32 %v362, %v423
  %v433 = vsub.f32 %v363, %v423
  %v434 = vsub.f32 %v364, %v423
  %v435 = vsub.f32 %v365, %v423
  %v436 = vsub.f32 %v366, %v423
  %v437 = vsub.f32 %v367, %v423
  %v438 = vsub.f32 %v368, %v423
  %v439 = vsub.f32 %v369, %v423
  %440 = vst [vmem:[%s3] sm:$0xff] %v424
  %441 = vst [vmem:[%s3 + $0x8] sm:$0xff] %v425
  %442 = vst [vmem:[%s3 + $0x10] sm:$0xff] %v426
  %443 = vst [vmem:[%s3 + $0x18] sm:$0xff] %v427
  %444 = vst [vmem:[%s3 + $0x20] sm:$0xff] %v428
  %445 = vst [vmem:[%s3 + $0x28] sm:$0xff] %v429
  %446 = vst [vmem:[%s3 + $0x30] sm:$0xff] %v430
  %447 = vst [vmem:[%s3 + $0x38] sm:$0xff] %v431
  %448 = vst [vmem:[%s3 + $0x40] sm:$0xff] %v432
  %449 = vst [vmem:[%s3 + $0x48] sm:$0xff] %v433
  %450 = vst [vmem:[%s3 + $0x50] sm:$0xff] %v434
  %451 = vst [vmem:[%s3 + $0x58] sm:$0xff] %v435
  %452 = vst [vmem:[%s3 + $0x60] sm:$0xff] %v436
  %453 = vst [vmem:[%s3 + $0x68] sm:$0xff] %v437
  %454 = vst [vmem:[%s3 + $0x70] sm:$0xff] %v438
  %455 = vst [vmem:[%s3 + $0x78] sm:$0xff] %v439
  // Predicated region
  $region14: #{generator_forward.1} parent=0 // pred_check
    _
  $region15: #{generator_forward.1} parent=0 // pred_check_branch
    %457 = sbr.rel (0) target = $region17
  $region16: #{generator_forward.1} parent=0 // pred_region
    _
  $region17: #{generator_forward.1} parent=0 // pred_fallthru
    _
  // Predicated region
  $region18: #{generator_forward.1} parent=0 // pred_check
    _
  $region19: #{generator_forward.1} parent=0 // pred_check_branch
    %459 = sbr.rel (0) target = $region21
  $region20: #{generator_forward.1} parent=0 // pred_region
    _
  $region21: #{generator_forward.1} parent=0 // pred_fallthru
    _

</llo_original>
